<compile_context>
chip_gen: v5e
topology: v5e:2x2
jax: 0.10.0
libtpu: 0.0.40
codegen_flags: <defaults>
</compile_context>

<pallas_src>
import functools

import jax
import jax.numpy as jnp
from jax.experimental import pallas as pl
from jax.experimental.pallas import tpu as pltpu


def _round_up(x, m):
    return (x + m - 1) // m * m


def decoder_kernel(x_ref, w3_ref, b3_ref, w2_ref, b2_ref, wr_ref, br_ref, o_ref):
    # Layer 1: Linear(z_dim -> 64) + ReLU. bf16 MXU inputs, f32 accumulation,
    # bias-add / ReLU in f32.
    x = x_ref[...].astype(jnp.bfloat16)
    h = jnp.dot(x, w3_ref[...], preferred_element_type=jnp.float32)
    h = jnp.maximum(h + b3_ref[...], 0.0)
    # Layer 2: Linear(64 -> 64) + ReLU
    h = jnp.dot(h.astype(jnp.bfloat16), w2_ref[...],
                preferred_element_type=jnp.float32)
    h = jnp.maximum(h + b2_ref[...], 0.0)
    # Layer 3: Linear(64 -> seqlen_padded)
    out = jnp.dot(h.astype(jnp.bfloat16), wr_ref[...],
                  preferred_element_type=jnp.float32)
    o_ref[...] = (out + br_ref[...]).astype(o_ref.dtype)


def baseline_decoder_forward(inp, params, *, tile_b=256):
    """inp: (B, z_dim) float32. params: dict of transposed weights + biases."""
    w3, b3 = params["w3"], params["b3"]
    w2, b2 = params["w2"], params["b2"]
    wr, br = params["wr"], params["br"]

    B, z_dim = inp.shape
    seqlen = wr.shape[1]

    # --- lane-dense output: pad the N (seqlen) axis to a multiple of 128 ---
    n_pad = _round_up(seqlen, 128)
    if n_pad != seqlen:
        wr = jnp.pad(wr, ((0, 0), (0, n_pad - seqlen)))
        br = jnp.pad(br, ((0, 0), (0, n_pad - seqlen)))

    # --- batch tiling: tile must be a multiple of 8, B padded to the tile ---
    tile_b = max(8, min(tile_b, _round_up(B, 8)))
    tile_b = _round_up(tile_b, 8)
    b_pad = _round_up(B, tile_b)
    if b_pad != B:
        inp = jnp.pad(inp, ((0, b_pad - B), (0, 0)))

    # bf16 weights: halves weight HBM reads / resident VMEM; MXU-native path.
    w3b = w3.astype(jnp.bfloat16)
    w2b = w2.astype(jnp.bfloat16)
    wrb = wr.astype(jnp.bfloat16)

    grid = (b_pad // tile_b,)

    def resident(a):
        # Constant index_map -> block stays VMEM-resident across grid steps.
        return pl.BlockSpec(a.shape, lambda i: (0,) * a.ndim)

    out = pl.pallas_call(
        decoder_kernel,
        out_shape=jax.ShapeDtypeStruct((b_pad, n_pad), jnp.float32),
        grid=grid,
        in_specs=[
            pl.BlockSpec((tile_b, z_dim), lambda i: (i, 0)),   # inp (batch-tiled)
            resident(w3b), resident(b3),
            resident(w2b), resident(b2),
            resident(wrb), resident(br),
        ],
        out_specs=pl.BlockSpec((tile_b, n_pad), lambda i: (i, 0)),
        compiler_params=pltpu.CompilerParams(
            dimension_semantics=("parallel",)),
    )(inp, w3b, b3, w2b, b2, wrb, br)

    return out[:B, :seqlen]


def init_params(key, z_dim, seqlen):
    """Deterministic synthetic parameters (PyTorch-like uniform fan-in init)."""
    ks = jax.random.split(key, 6)

    def linear(kw, kb, fan_in, fan_out):
        bound = 1.0 / jnp.sqrt(fan_in)
        # stored as (in_features, out_features) == PyTorch weight transposed
        w = jax.random.uniform(kw, (fan_in, fan_out), jnp.float32, -bound, bound)
        b = jax.random.uniform(kb, (1, fan_out), jnp.float32, -bound, bound)
        return w, b

    w3, b3 = linear(ks[0], ks[1], z_dim, 64)   # linear3: z_dim -> 64
    w2, b2 = linear(ks[2], ks[3], 64, 64)      # linear2: 64 -> 64
    wr, br = linear(ks[4], ks[5], 64, seqlen)  # reconstruct: 64 -> seqlen
    return {"w3": w3, "b3": b3, "w2": w2, "b2": b2, "wr": wr, "br": br}


def reference_forward_bf16(inp, params):
    """Pure-JAX reference matching the kernel's precision (bf16 MXU inputs,
    f32 accumulation, f32 bias-add / ReLU)."""
    bf = lambda a: a.astype(jnp.bfloat16)
    h = jnp.dot(bf(inp), bf(params["w3"]), preferred_element_type=jnp.float32)
    h = jnp.maximum(h + params["b3"], 0.0)
    h = jnp.dot(bf(h), bf(params["w2"]), preferred_element_type=jnp.float32)
    h = jnp.maximum(h + params["b2"], 0.0)
    out = jnp.dot(bf(h), bf(params["wr"]), preferred_element_type=jnp.float32)
    return out + params["br"]


def reference_forward_f32(inp, params):
    h = jnp.maximum(inp @ params["w3"] + params["b3"], 0.0)
    h = jnp.maximum(h @ params["w2"] + params["b2"], 0.0)
    return h @ params["wr"] + params["br"]


if __name__ == "__main__":
    key = jax.random.PRNGKey(0)
    k_inp, k_par = jax.random.split(key)

    batch, z_dim, seqlen = 200, 32, 8
    inp = jax.random.normal(k_inp, (batch, z_dim), jnp.float32)
    params = init_params(k_par, z_dim, seqlen)

    fwd = jax.jit(functools.partial(baseline_decoder_forward, tile_b=64))
    out = jax.block_until_ready(fwd(inp, params))

    assert out.shape == (batch, seqlen)
    # Tight check against a precision-matched reference.
    ref_bf16 = reference_forward_bf16(inp, params)
    assert jnp.allclose(out, ref_bf16, atol=1e-3, rtol=1e-3)
    # Loose sanity check against the full-f32 reference.
    ref_f32 = reference_forward_f32(inp, params)
    assert jnp.allclose(out, ref_f32, atol=5e-2, rtol=5e-2)

    print("KERNEL_OK")
</pallas_src>

<mosaic_0001>
module attributes {stable_mosaic.version = 11 : i64} {
  func.func @decoder_kernel(%arg0: i32, %arg1: memref<64x32xf32, #tpu.memory_space<vmem>>, %arg2: memref<32x64xbf16, #tpu.memory_space<vmem>>, %arg3: memref<1x64xf32, #tpu.memory_space<vmem>>, %arg4: memref<64x64xbf16, #tpu.memory_space<vmem>>, %arg5: memref<1x64xf32, #tpu.memory_space<vmem>>, %arg6: memref<64x128xbf16, #tpu.memory_space<vmem>>, %arg7: memref<1x128xf32, #tpu.memory_space<vmem>>, %arg8: memref<64x128xf32, #tpu.memory_space<vmem>>) attributes {dimension_semantics = [#tpu.dimension_semantics<parallel>], iteration_bounds = array<i64: 4>, scalar_prefetch = 0 : i64, scratch_operands = 0 : i64, tpu.core_type = #tpu.core_type<tc>, window_params = [{transform_indices = @transform_0, window_bounds = array<i64: 64, 32>}, {pipeline_mode = #tpu.pipeline_mode<synchronous>, transform_indices = @transform_1, window_bounds = array<i64: 32, 64>}, {pipeline_mode = #tpu.pipeline_mode<synchronous>, transform_indices = @transform_2, window_bounds = array<i64: 1, 64>}, {pipeline_mode = #tpu.pipeline_mode<synchronous>, transform_indices = @transform_3, window_bounds = array<i64: 64, 64>}, {pipeline_mode = #tpu.pipeline_mode<synchronous>, transform_indices = @transform_4, window_bounds = array<i64: 1, 64>}, {pipeline_mode = #tpu.pipeline_mode<synchronous>, transform_indices = @transform_5, window_bounds = array<i64: 64, 128>}, {pipeline_mode = #tpu.pipeline_mode<synchronous>, transform_indices = @transform_6, window_bounds = array<i64: 1, 128>}, {transform_indices = @transform_7, window_bounds = array<i64: 64, 128>}]} {
    %c0 = arith.constant 0 : index
    %c0_0 = arith.constant 0 : index
    %0 = vector.load %arg1[%c0, %c0_0] : memref<64x32xf32, #tpu.memory_space<vmem>>, vector<64x32xf32>
    %1 = arith.truncf %0 : vector<64x32xf32> to vector<64x32xbf16>
    %c0_1 = arith.constant 0 : index
    %c0_2 = arith.constant 0 : index
    %2 = vector.load %arg2[%c0_1, %c0_2] : memref<32x64xbf16, #tpu.memory_space<vmem>>, vector<32x64xbf16>
    %cst = arith.constant dense<0.000000e+00> : vector<64x64xf32>
    %3 = tpu.matmul %1, %2, %cst {dimension_numbers = #tpu.dot_dimension_numbers<[1], [0], [0], [1], [0, 0, 1, 1], [], []>} : vector<64x32xbf16>, vector<32x64xbf16>, vector<64x64xf32> -> vector<64x64xf32>
    %c0_3 = arith.constant 0 : index
    %c0_4 = arith.constant 0 : index
    %4 = vector.load %arg3[%c0_3, %c0_4] : memref<1x64xf32, #tpu.memory_space<vmem>>, vector<1x64xf32>
    %5 = vector.broadcast %4 : vector<1x64xf32> to vector<64x64xf32>
    %6 = arith.addf %3, %5 : vector<64x64xf32>
    %cst_5 = arith.constant 0.000000e+00 : f32
    %7 = vector.broadcast %cst_5 : f32 to vector<64x64xf32>
    %8 = arith.maximumf %6, %7 : vector<64x64xf32>
    %9 = arith.truncf %8 : vector<64x64xf32> to vector<64x64xbf16>
    %c0_6 = arith.constant 0 : index
    %c0_7 = arith.constant 0 : index
    %10 = vector.load %arg4[%c0_6, %c0_7] : memref<64x64xbf16, #tpu.memory_space<vmem>>, vector<64x64xbf16>
    %cst_8 = arith.constant dense<0.000000e+00> : vector<64x64xf32>
    %11 = tpu.matmul %9, %10, %cst_8 {dimension_numbers = #tpu.dot_dimension_numbers<[1], [0], [0], [1], [0, 0, 1, 1], [], []>} : vector<64x64xbf16>, vector<64x64xbf16>, vector<64x64xf32> -> vector<64x64xf32>
    %c0_9 = arith.constant 0 : index
    %c0_10 = arith.constant 0 : index
    %12 = vector.load %arg5[%c0_9, %c0_10] : memref<1x64xf32, #tpu.memory_space<vmem>>, vector<1x64xf32>
    %13 = vector.broadcast %12 : vector<1x64xf32> to vector<64x64xf32>
    %14 = arith.addf %11, %13 : vector<64x64xf32>
    %cst_11 = arith.constant 0.000000e+00 : f32
    %15 = vector.broadcast %cst_11 : f32 to vector<64x64xf32>
    %16 = arith.maximumf %14, %15 : vector<64x64xf32>
    %17 = arith.truncf %16 : vector<64x64xf32> to vector<64x64xbf16>
    %c0_12 = arith.constant 0 : index
    %c0_13 = arith.constant 0 : index
    %18 = vector.load %arg6[%c0_12, %c0_13] : memref<64x128xbf16, #tpu.memory_space<vmem>>, vector<64x128xbf16>
    %cst_14 = arith.constant dense<0.000000e+00> : vector<64x128xf32>
    %19 = tpu.matmul %17, %18, %cst_14 {dimension_numbers = #tpu.dot_dimension_numbers<[1], [0], [0], [1], [0, 0, 1, 1], [], []>} : vector<64x64xbf16>, vector<64x128xbf16>, vector<64x128xf32> -> vector<64x128xf32>
    %c0_15 = arith.constant 0 : index
    %c0_16 = arith.constant 0 : index
    %20 = vector.load %arg7[%c0_15, %c0_16] : memref<1x128xf32, #tpu.memory_space<vmem>>, vector<1x128xf32>
    %21 = vector.broadcast %20 : vector<1x128xf32> to vector<64x128xf32>
    %22 = arith.addf %19, %21 : vector<64x128xf32>
    %c0_17 = arith.constant 0 : index
    %c0_18 = arith.constant 0 : index
    %23 = vector.load %arg8[%c0_17, %c0_18] : memref<64x128xf32, #tpu.memory_space<vmem>>, vector<64x128xf32>
    tpu.vector_store %arg8[%c0_17, %c0_18], %22 {strides = array<i32>} : memref<64x128xf32, #tpu.memory_space<vmem>>, vector<64x128xf32>,
    return
  }
  func.func @transform_0(%arg0: i32) -> (i32, i32) {
    %c0_i32 = arith.constant 0 : i32
    %c0_i32_0 = arith.constant 0 : i32
    return %arg0, %c0_i32 : i32, i32
  }
  func.func @transform_1(%arg0: i32) -> (i32, i32) {
    %c0_i32 = arith.constant 0 : i32
    %c0_i32_0 = arith.constant 0 : i32
    %c0_i32_1 = arith.constant 0 : i32
    return %c0_i32, %c0_i32_0 : i32, i32
  }
  func.func @transform_2(%arg0: i32) -> (i32, i32) {
    %c0_i32 = arith.constant 0 : i32
    %c0_i32_0 = arith.constant 0 : i32
    %c0_i32_1 = arith.constant 0 : i32
    return %c0_i32, %c0_i32_0 : i32, i32
  }
  func.func @transform_3(%arg0: i32) -> (i32, i32) {
    %c0_i32 = arith.constant 0 : i32
    %c0_i32_0 = arith.constant 0 : i32
    %c0_i32_1 = arith.constant 0 : i32
    return %c0_i32, %c0_i32_0 : i32, i32
  }
  func.func @transform_4(%arg0: i32) -> (i32, i32) {
    %c0_i32 = arith.constant 0 : i32
    %c0_i32_0 = arith.constant 0 : i32
    %c0_i32_1 = arith.constant 0 : i32
    return %c0_i32, %c0_i32_0 : i32, i32
  }
  func.func @transform_5(%arg0: i32) -> (i32, i32) {
    %c0_i32 = arith.constant 0 : i32
    %c0_i32_0 = arith.constant 0 : i32
    %c0_i32_1 = arith.constant 0 : i32
    return %c0_i32, %c0_i32_0 : i32, i32
  }
  func.func @transform_6(%arg0: i32) -> (i32, i32) {
    %c0_i32 = arith.constant 0 : i32
    %c0_i32_0 = arith.constant 0 : i32
    %c0_i32_1 = arith.constant 0 : i32
    return %c0_i32, %c0_i32_0 : i32, i32
  }
  func.func @transform_7(%arg0: i32) -> (i32, i32) {
    %c0_i32 = arith.constant 0 : i32
    %c0_i32_0 = arith.constant 0 : i32
    return %arg0, %c0_i32 : i32, i32
  }
}

</mosaic_0001>

<llo_original>
// kernel: baseline_decoder_forward.1
$region0: #{baseline_decoder_forward.1}
  #allocation0 [shape = 'u32[]', space=smem, size = 0x4, offset = 0x4, fixed_abs, tag = 'smem constant byte address 0x4 - core index']
  #allocation1 [shape = 'u32[72,128]{1,0:T(1,128)}', space=vmem, size = 0x9000, scoped, tag = 'internal scratch']
  %s0 = inlined_call_operand.vmem [shape: f32[256,32], index: 0, kind: input, shape index: {}]
  %s1 = inlined_call_operand.vmem [shape: bf16[32,64], index: 1, kind: input, shape index: {}]
  %s2 = inlined_call_operand.vmem [shape: f32[1,64], index: 2, kind: input, shape index: {}]
  %s3 = inlined_call_operand.vmem [shape: bf16[64,64], index: 3, kind: input, shape index: {}]
  %s4 = inlined_call_operand.vmem [shape: f32[1,64], index: 4, kind: input, shape index: {}]
  %s5 = inlined_call_operand.vmem [shape: bf16[64,128], index: 5, kind: input, shape index: {}]
  %s6 = inlined_call_operand.vmem [shape: f32[1,128], index: 6, kind: input, shape index: {}]
  %s7 = inlined_call_operand.vmem [shape: f32[256,128], index: 7, kind: output, shape index: {}]
  %s8 = sld [smem:[#allocation0]]
  $region61: #{baseline_decoder_forward.1} parent=0
    _
  %s10 = ssub.s32 1, %s8
  %s11 = scalar_select 0, %s10, %s8
  loop: start=0, step=1, limit=6
  $region2: #{baseline_decoder_forward.1} parent=0 // loop_pre_header
    _
  $region3: #{baseline_decoder_forward.1} parent=0 // loop_header
    %s13 = sphi 0, %s17
    %p14 = scmp.ge.s32.totalorder %s13, 6
    %s23 = sphi 0, %s25
    %s26 = sphi 0, %s23
    %s27 = sphi 0, %s26
    %s43 = sphi 0, %s27
    %s47 = sphi 0, %s47
    %s49 = sphi 0, %s47
    %s50 = sphi 0, %s49
    %s64 = sphi 0, %s50
    %s68 = sphi 0, %s68
    %s70 = sphi 0, %s68
    %s71 = sphi 0, %s70
    %s85 = sphi 0, %s71
    %s89 = sphi 0, %s89
    %s91 = sphi 0, %s89
    %s92 = sphi 0, %s91
    %s106 = sphi 0, %s92
    %s110 = sphi 0, %s110
    %s112 = sphi 0, %s110
    %s113 = sphi 0, %s112
    %s127 = sphi 0, %s113
    %s131 = sphi 0, %s131
    %s133 = sphi 0, %s131
    %s134 = sphi 0, %s133
    %s148 = sphi 0, %s134
    %s152 = sphi 0, %s152
    %s154 = sphi 0, %s152
    %s155 = sphi 0, %s154
    %s169 = sphi 0, %s155
    %s175 = sphi 0, %s177
    %s178 = sphi 0, %s175
    %s179 = sphi 0, %s178
    %s195 = sphi 0, %s179
  $region4: #{baseline_decoder_forward.1} parent=0 // loop_header_branch
    %16 = sbr.rel (%p14) target = $region8
  $region5: #{baseline_decoder_forward.1} parent=0 // loop_body
    %s18 = ssub.s32 %s13, 1
    %s19 = ssub.s32 %s13, 2
    %s20 = sadd.s32 %s13, 1
    %s21 = ssub.s32 %s13, %s20
    %p22 = scmp.eq.s32.totalorder %s21, 0
    %s24 = sadd.s32 %s23, 1
    %s25 = scalar_select %p22, %s23, %s24
    %p28 = pneg %p22
    %p29 = scmp.eq.s32.totalorder %s13, 3
    %p30 = por %p28, %p29
    %p31 = scmp.ne.s32.totalorder %s23, %s26
    %p32 = scmp.eq.s32.totalorder %s13, 0
    %p33 = por %p31, %p32
    %p34 = scmp.ne.s32.totalorder %s23, %s26
    %p35 = scmp.eq.s32.totalorder %s18, 3
    %p36 = por %p34, %p35
    %p37 = scmp.ne.s32.totalorder %s26, %s27
    %p38 = scmp.eq.s32.totalorder %s18, 0
    %p39 = por %p37, %p38
    %p40 = scmp.ne.s32.totalorder %s26, %s27
    %p41 = scmp.eq.s32.totalorder %s19, 3
    %p42 = por %p40, %p41
    %p44 = scmp.ne.s32.totalorder %s27, %s43
    %p45 = scmp.eq.s32.totalorder %s19, 0
    %p46 = por %p44, %p45
    %s48 = sadd.s32 %s47, 1
    %p51 = scmp.eq.s32.totalorder %s13, 3
    %p52 = scmp.ne.s32.totalorder %s47, %s49
    %p53 = scmp.eq.s32.totalorder %s13, 0
    %p54 = por %p52, %p53
    %p55 = scmp.ne.s32.totalorder %s47, %s49
    %p56 = scmp.eq.s32.totalorder %s18, 3
    %p57 = por %p55, %p56
    %p58 = scmp.ne.s32.totalorder %s49, %s50
    %p59 = scmp.eq.s32.totalorder %s18, 0
    %p60 = por %p58, %p59
    %p61 = scmp.ne.s32.totalorder %s49, %s50
    %p62 = scmp.eq.s32.totalorder %s19, 3
    %p63 = por %p61, %p62
    %p65 = scmp.ne.s32.totalorder %s50, %s64
    %p66 = scmp.eq.s32.totalorder %s19, 0
    %p67 = por %p65, %p66
    %s69 = sadd.s32 %s68, 1
    %p72 = scmp.eq.s32.totalorder %s13, 3
    %p73 = scmp.ne.s32.totalorder %s68, %s70
    %p74 = scmp.eq.s32.totalorder %s13, 0
    %p75 = por %p73, %p74
    %p76 = scmp.ne.s32.totalorder %s68, %s70
    %p77 = scmp.eq.s32.totalorder %s18, 3
    %p78 = por %p76, %p77
    %p79 = scmp.ne.s32.totalorder %s70, %s71
    %p80 = scmp.eq.s32.totalorder %s18, 0
    %p81 = por %p79, %p80
    %p82 = scmp.ne.s32.totalorder %s70, %s71
    %p83 = scmp.eq.s32.totalorder %s19, 3
    %p84 = por %p82, %p83
    %p86 = scmp.ne.s32.totalorder %s71, %s85
    %p87 = scmp.eq.s32.totalorder %s19, 0
    %p88 = por %p86, %p87
    %s90 = sadd.s32 %s89, 1
    %p93 = scmp.eq.s32.totalorder %s13, 3
    %p94 = scmp.ne.s32.totalorder %s89, %s91
    %p95 = scmp.eq.s32.totalorder %s13, 0
    %p96 = por %p94, %p95
    %p97 = scmp.ne.s32.totalorder %s89, %s91
    %p98 = scmp.eq.s32.totalorder %s18, 3
    %p99 = por %p97, %p98
    %p100 = scmp.ne.s32.totalorder %s91, %s92
    %p101 = scmp.eq.s32.totalorder %s18, 0
    %p102 = por %p100, %p101
    %p103 = scmp.ne.s32.totalorder %s91, %s92
    %p104 = scmp.eq.s32.totalorder %s19, 3
    %p105 = por %p103, %p104
    %p107 = scmp.ne.s32.totalorder %s92, %s106
    %p108 = scmp.eq.s32.totalorder %s19, 0
    %p109 = por %p107, %p108
    %s111 = sadd.s32 %s110, 1
    %p114 = scmp.eq.s32.totalorder %s13, 3
    %p115 = scmp.ne.s32.totalorder %s110, %s112
    %p116 = scmp.eq.s32.totalorder %s13, 0
    %p117 = por %p115, %p116
    %p118 = scmp.ne.s32.totalorder %s110, %s112
    %p119 = scmp.eq.s32.totalorder %s18, 3
    %p120 = por %p118, %p119
    %p121 = scmp.ne.s32.totalorder %s112, %s113
    %p122 = scmp.eq.s32.totalorder %s18, 0
    %p123 = por %p121, %p122
    %p124 = scmp.ne.s32.totalorder %s112, %s113
    %p125 = scmp.eq.s32.totalorder %s19, 3
    %p126 = por %p124, %p125
    %p128 = scmp.ne.s32.totalorder %s113, %s127
    %p129 = scmp.eq.s32.totalorder %s19, 0
    %p130 = por %p128, %p129
    %s132 = sadd.s32 %s131, 1
    %p135 = scmp.eq.s32.totalorder %s13, 3
    %p136 = scmp.ne.s32.totalorder %s131, %s133
    %p137 = scmp.eq.s32.totalorder %s13, 0
    %p138 = por %p136, %p137
    %p139 = scmp.ne.s32.totalorder %s131, %s133
    %p140 = scmp.eq.s32.totalorder %s18, 3
    %p141 = por %p139, %p140
    %p142 = scmp.ne.s32.totalorder %s133, %s134
    %p143 = scmp.eq.s32.totalorder %s18, 0
    %p144 = por %p142, %p143
    %p145 = scmp.ne.s32.totalorder %s133, %s134
    %p146 = scmp.eq.s32.totalorder %s19, 3
    %p147 = por %p145, %p146
    %p149 = scmp.ne.s32.totalorder %s134, %s148
    %p150 = scmp.eq.s32.totalorder %s19, 0
    %p151 = por %p149, %p150
    %s153 = sadd.s32 %s152, 1
    %p156 = scmp.eq.s32.totalorder %s13, 3
    %p157 = scmp.ne.s32.totalorder %s152, %s154
    %p158 = scmp.eq.s32.totalorder %s13, 0
    %p159 = por %p157, %p158
    %p160 = scmp.ne.s32.totalorder %s152, %s154
    %p161 = scmp.eq.s32.totalorder %s18, 3
    %p162 = por %p160, %p161
    %p163 = scmp.ne.s32.totalorder %s154, %s155
    %p164 = scmp.eq.s32.totalorder %s18, 0
    %p165 = por %p163, %p164
    %p166 = scmp.ne.s32.totalorder %s154, %s155
    %p167 = scmp.eq.s32.totalorder %s19, 3
    %p168 = por %p166, %p167
    %p170 = scmp.ne.s32.totalorder %s155, %s169
    %p171 = scmp.eq.s32.totalorder %s19, 0
    %p172 = por %p170, %p171
    %s173 = ssub.s32 %s13, %s20
    %p174 = scmp.eq.s32.totalorder %s173, 0
    %s176 = sadd.s32 %s175, 1
    %s177 = scalar_select %p174, %s175, %s176
    %p180 = pneg %p174
    %p181 = scmp.eq.s32.totalorder %s13, 3
    %p182 = por %p180, %p181
    %p183 = scmp.ne.s32.totalorder %s175, %s178
    %p184 = scmp.eq.s32.totalorder %s13, 0
    %p185 = por %p183, %p184
    %p186 = scmp.ne.s32.totalorder %s175, %s178
    %p187 = scmp.eq.s32.totalorder %s18, 3
    %p188 = por %p186, %p187
    %p189 = scmp.ne.s32.totalorder %s178, %s179
    %p190 = scmp.eq.s32.totalorder %s18, 0
    %p191 = por %p189, %p190
    %p192 = scmp.ne.s32.totalorder %s178, %s179
    %p193 = scmp.eq.s32.totalorder %s19, 3
    %p194 = por %p192, %p193
    %p196 = scmp.ne.s32.totalorder %s179, %s195
    %p197 = scmp.eq.s32.totalorder %s19, 0
    %p198 = por %p196, %p197
    %p199 = scmp.le.s32.totalorder 1, %s13
    %p200 = scmp.lt.s32.totalorder %s13, 5
    %p201 = pnand %p199, %p200
    %p202 = pneg %p201
    // Predicated region
    $region9: #{baseline_decoder_forward.1} parent=5 // pred_check
      _
    $region10: #{baseline_decoder_forward.1} parent=5 // pred_check_branch
      %204 = sbr.rel (%p201) target = $region12
    $region11: #{baseline_decoder_forward.1} parent=5 // pred_region
      %s205 = ssub.s32 %s13, 1
      // Predicated region
      $region13: #{baseline_decoder_forward.1} parent=11 // pred_check
        %p206 = pneg %p60
      $region14: #{baseline_decoder_forward.1} parent=11 // pred_check_branch
        %208 = sbr.rel (%p206) target = $region16
      $region15: #{baseline_decoder_forward.1} parent=11 // pred_region
        _
      $region16: #{baseline_decoder_forward.1} parent=11 // pred_fallthru
        _
      // Predicated region
      $region17: #{baseline_decoder_forward.1} parent=11 // pred_check
        %p209 = pneg %p81
      $region18: #{baseline_decoder_forward.1} parent=11 // pred_check_branch
        %211 = sbr.rel (%p209) target = $region20
      $region19: #{baseline_decoder_forward.1} parent=11 // pred_region
        _
      $region20: #{baseline_decoder_forward.1} parent=11 // pred_fallthru
        _
      // Predicated region
      $region21: #{baseline_decoder_forward.1} parent=11 // pred_check
        %p212 = pneg %p102
      $region22: #{baseline_decoder_forward.1} parent=11 // pred_check_branch
        %214 = sbr.rel (%p212) target = $region24
      $region23: #{baseline_decoder_forward.1} parent=11 // pred_region
        _
      $region24: #{baseline_decoder_forward.1} parent=11 // pred_fallthru
        _
      // Predicated region
      $region25: #{baseline_decoder_forward.1} parent=11 // pred_check
        %p215 = pneg %p123
      $region26: #{baseline_decoder_forward.1} parent=11 // pred_check_branch
        %217 = sbr.rel (%p215) target = $region28
      $region27: #{baseline_decoder_forward.1} parent=11 // pred_region
        _
      $region28: #{baseline_decoder_forward.1} parent=11 // pred_fallthru
        _
      // Predicated region
      $region29: #{baseline_decoder_forward.1} parent=11 // pred_check
        %p218 = pneg %p144
      $region30: #{baseline_decoder_forward.1} parent=11 // pred_check_branch
        %220 = sbr.rel (%p218) target = $region32
      $region31: #{baseline_decoder_forward.1} parent=11 // pred_region
        _
      $region32: #{baseline_decoder_forward.1} parent=11 // pred_fallthru
        _
      // Predicated region
      $region33: #{baseline_decoder_forward.1} parent=11 // pred_check
        %p221 = pneg %p165
      $region34: #{baseline_decoder_forward.1} parent=11 // pred_check_branch
        %223 = sbr.rel (%p221) target = $region36
      $region35: #{baseline_decoder_forward.1} parent=11 // pred_region
        _
      $region36: #{baseline_decoder_forward.1} parent=11 // pred_fallthru
        _
    $region12: #{baseline_decoder_forward.1} parent=5 // pred_fallthru
      _
    %p224 = scmp.lt.s32.totalorder %s13, 4
    // Predicated region
    $region37: #{baseline_decoder_forward.1} parent=5 // pred_check
      %p225 = pneg %p224
    $region38: #{baseline_decoder_forward.1} parent=5 // pred_check_branch
      %227 = sbr.rel (%p225) target = $region40
    $region39: #{baseline_decoder_forward.1} parent=5 // pred_region
      // Predicated region
      $region41: #{baseline_decoder_forward.1} parent=39 // pred_check
        %p228 = pneg %p33
      $region42: #{baseline_decoder_forward.1} parent=39 // pred_check_branch
        %230 = sbr.rel (%p228) target = $region44
      $region43: #{baseline_decoder_forward.1} parent=39 // pred_region
        %s231 = smul.u32 8, %s13
        %p232 = scmp.lt.s32.totalorder %s231, 31
        %s233 = scalar_select %p232, %s231, 31
        %s234 = smul.addr %s233, 8
        %s235 = scalar_lea.vmem %s0, %s234
        %s236 = smul.u32 8, %s13
      $region44: #{baseline_decoder_forward.1} parent=39 // pred_fallthru
        _
    $region40: #{baseline_decoder_forward.1} parent=5 // pred_fallthru
      _
    %p237 = scmp.le.s32.totalorder 1, %s13
    %p238 = scmp.lt.s32.totalorder %s13, 5
    %p239 = pnand %p237, %p238
    %p240 = pneg %p239
    // Predicated region
    $region45: #{baseline_decoder_forward.1} parent=5 // pred_check
      _
    $region46: #{baseline_decoder_forward.1} parent=5 // pred_check_branch
      %242 = sbr.rel (%p239) target = $region48
    $region47: #{baseline_decoder_forward.1} parent=5 // pred_region
      %s243 = ssub.s32 %s13, 1
      %s244 = smul.u32 8, %s18
      %p245 = scmp.lt.s32.totalorder %s244, 31
      %s246 = scalar_select %p245, %s244, 31
      %s247 = smul.addr %s246, 8
      %s248 = scalar_lea.vmem %s0, %s247
      %p249 = pneg %p39
      %p250 = pneg %p36
      %p251 = pneg %p60
      %p252 = pneg %p57
      %p253 = pneg %p81
      %p254 = pneg %p78
      %p255 = pneg %p102
      %p256 = pneg %p99
      %p257 = pneg %p123
      %p258 = pneg %p120
      %p259 = pneg %p144
      %p260 = pneg %p141
      %p261 = pneg %p165
      %p262 = pneg %p162
      %p263 = pneg %p191
      %p264 = pneg %p188
      %s265 = smul.u32 8, %s18
      %p266 = scmp.lt.s32.totalorder %s265, 31
      %s267 = scalar_select %p266, %s265, 31
      %s268 = smul.addr %s267, 8
      %s269 = scalar_lea.vmem %s7, %s268
      %s270 = smul.u32 8, %s18
      %p271 = scmp.lt.s32.totalorder %s270, 31
      %s272 = scalar_select %p271, %s270, 31
      %s273 = smul.addr %s272, 8
      %s274 = scalar_lea.vmem %s0, %s273
      %s275 = smul.u32 8, %s18
      %s276 = smul.u32 8, %s18
      %p277 = scmp.lt.s32.totalorder %s276, 31
      %s278 = scalar_select %p277, %s276, 31
      %s279 = smul.addr %s278, 8
      %s280 = scalar_lea.vmem %s7, %s279
      %s281 = smul.u32 8, %s18
      %v283 = vld [vmem:[%s274] sm:$0xff]
      %v284 = vld [vmem:[%s274 + $0x8] sm:$0xff]
      %v285 = vld [vmem:[%s274 + $0x10] sm:$0xff]
      %v286 = vld [vmem:[%s274 + $0x18] sm:$0xff]
      %v287 = vld [vmem:[%s274 + $0x20] sm:$0xff]
      %v288 = vld [vmem:[%s274 + $0x28] sm:$0xff]
      %v289 = vld [vmem:[%s274 + $0x30] sm:$0xff]
      %v290 = vld [vmem:[%s274 + $0x38] sm:$0xff]
      %v291 = vpack.c.bf16 %v284, %v283
      %v292 = vpack.c.bf16 %v286, %v285
      %v293 = vpack.c.bf16 %v288, %v287
      %v294 = vpack.c.bf16 %v290, %v289
      %v295 = vld [vmem:[%s1] sm:$0xf]
      %v296 = vld [vmem:[%s1 + $0x4] sm:$0xf]
      %v297 = vld [vmem:[%s1 + $0x8] sm:$0xf]
      %v298 = vld [vmem:[%s1 + $0xc] sm:$0xf]
      %v299 = vld [vmem:[%s2] sm:$0x1]
      %v301 = vperm.slane %v299, 0
      %v307 = vunpack.c.l.b16 %v295
      %v308 = vunpack.c.l.b16 %v296
      %v309 = vunpack.c.l.b16 %v297
      %v310 = vunpack.c.l.b16 %v298
      %v311 = vpack.c.b16 %v308, %v307
      %v312 = vpack.c.b16 %v310, %v309
      %vm315 = vcmask 261120
      %v317 = vsel %vm315, %v291, 0
      %v320 = vsel %vm315, %v292, 0
      %v323 = vsel %vm315, %v293, 0
      %v326 = vsel %vm315, %v294, 0
      %328 = vmatpush.bf16.msra.mxu0 0
      %329 = vmatpush.bf16.msra.mxu0 0
      %330 = vmatpush.bf16.msra.mxu0 0
      %331 = vmatpush.bf16.msra.mxu0 0
      %332 = vmatpush.bf16.msra.mxu0 0
      %333 = vmatpush.bf16.msra.mxu0 0
      %334 = vmatpush.bf16.msra.mxu0 %v312
      %335 = vmatpush.bf16.msra.mxu0 %v311
      %336 = vmatmul.bf16.gmra.mxu0 %v317
      %v337 = vpop.f32.mrf.mxu0
      %v338 = vadd.f32 %v301, %v337
      %v339 = vpop.f32.mrf.mxu0
      %v340 = vadd.f32 %v301, %v339
      %341 = vmatmul.bf16.gmra.mxu0 %v320
      %v342 = vpop.f32.mrf.mxu0
      %v343 = vadd.f32 %v301, %v342
      %v344 = vpop.f32.mrf.mxu0
      %v345 = vadd.f32 %v301, %v344
      %346 = vmatmul.bf16.gmra.mxu0 %v323
      %v347 = vpop.f32.mrf.mxu0
      %v348 = vadd.f32 %v301, %v347
      %v349 = vpop.f32.mrf.mxu0
      %v350 = vadd.f32 %v301, %v349
      %351 = vmatmul.bf16.gmra.mxu0 %v326
      %v352 = vpop.f32.mrf.mxu0
      %v353 = vadd.f32 %v301, %v352
      %v354 = vpop.f32.mrf.mxu0
      %v355 = vadd.f32 %v301, %v354
      %356 = vdwg.mxu0
      %v357 = vmax.f32 %v338, 0.0
      %v358 = vmax.f32 %v340, 0.0
      %v359 = vmax.f32 %v343, 0.0
      %v360 = vmax.f32 %v345, 0.0
      %v361 = vmax.f32 %v348, 0.0
      %v362 = vmax.f32 %v350, 0.0
      %v363 = vmax.f32 %v353, 0.0
      %v364 = vmax.f32 %v355, 0.0
      %v365 = vpack.c.bf16 %v358, %v357
      %v366 = vpack.c.bf16 %v360, %v359
      %v367 = vpack.c.bf16 %v362, %v361
      %v368 = vpack.c.bf16 %v364, %v363
      %v369 = vld [vmem:[%s3] sm:$0xf]
      %v370 = vld [vmem:[%s3 + $0x4] sm:$0xf]
      %v371 = vld [vmem:[%s3 + $0x8] sm:$0xf]
      %v372 = vld [vmem:[%s3 + $0xc] sm:$0xf]
      %v373 = vld [vmem:[%s3 + $0x10] sm:$0xf]
      %v374 = vld [vmem:[%s3 + $0x14] sm:$0xf]
      %v375 = vld [vmem:[%s3 + $0x18] sm:$0xf]
      %v376 = vld [vmem:[%s3 + $0x1c] sm:$0xf]
      %v377 = vld [vmem:[%s4] sm:$0x1]
      %v379 = vperm.slane %v377, 0
      %v389 = vunpack.c.l.b16 %v369
      %v390 = vunpack.c.l.b16 %v370
      %v391 = vunpack.c.l.b16 %v371
      %v392 = vunpack.c.l.b16 %v372
      %v393 = vunpack.c.l.b16 %v373
      %v394 = vunpack.c.l.b16 %v374
      %v395 = vunpack.c.l.b16 %v375
      %v396 = vunpack.c.l.b16 %v376
      %v397 = vpack.c.b16 %v390, %v389
      %v398 = vpack.c.b16 %v392, %v391
      %v399 = vpack.c.b16 %v394, %v393
      %v400 = vpack.c.b16 %v396, %v395
      %vm405 = vcmask 523264
      %v407 = vsel %vm405, %v365, 0
      %v410 = vsel %vm405, %v366, 0
      %v413 = vsel %vm405, %v367, 0
      %v416 = vsel %vm405, %v368, 0
      %418 = vmatpush.bf16.msra.mxu0 0
      %419 = vmatpush.bf16.msra.mxu0 0
      %420 = vmatpush.bf16.msra.mxu0 0
      %421 = vmatpush.bf16.msra.mxu0 0
      %422 = vmatpush.bf16.msra.mxu0 %v400
      %423 = vmatpush.bf16.msra.mxu0 %v399
      %424 = vmatpush.bf16.msra.mxu0 %v398
      %425 = vmatpush.bf16.msra.mxu0 %v397
      %426 = vmatmul.bf16.gmra.mxu0 %v407
      %v427 = vpop.f32.mrf.mxu0
      %v428 = vadd.f32 %v379, %v427
      %v429 = vpop.f32.mrf.mxu0
      %v430 = vadd.f32 %v379, %v429
      %431 = vmatmul.bf16.gmra.mxu0 %v410
      %v432 = vpop.f32.mrf.mxu0
      %v433 = vadd.f32 %v379, %v432
      %v434 = vpop.f32.mrf.mxu0
      %v435 = vadd.f32 %v379, %v434
      %436 = vmatmul.bf16.gmra.mxu0 %v413
      %v437 = vpop.f32.mrf.mxu0
      %v438 = vadd.f32 %v379, %v437
      %v439 = vpop.f32.mrf.mxu0
      %v440 = vadd.f32 %v379, %v439
      %441 = vmatmul.bf16.gmra.mxu0 %v416
      %v442 = vpop.f32.mrf.mxu0
      %v443 = vadd.f32 %v379, %v442
      %v444 = vpop.f32.mrf.mxu0
      %v445 = vadd.f32 %v379, %v444
      %446 = vdwg.mxu0
      %v447 = vmax.f32 %v428, 0.0
      %v448 = vmax.f32 %v430, 0.0
      %v449 = vmax.f32 %v433, 0.0
      %v450 = vmax.f32 %v435, 0.0
      %v451 = vmax.f32 %v438, 0.0
      %v452 = vmax.f32 %v440, 0.0
      %v453 = vmax.f32 %v443, 0.0
      %v454 = vmax.f32 %v445, 0.0
      %v455 = vpack.c.bf16 %v448, %v447
      %v456 = vpack.c.bf16 %v450, %v449
      %v457 = vpack.c.bf16 %v452, %v451
      %v458 = vpack.c.bf16 %v454, %v453
      %v459 = vld [vmem:[%s5] sm:$0xf]
      %v460 = vld [vmem:[%s5 + $0x4] sm:$0xf]
      %v461 = vld [vmem:[%s5 + $0x8] sm:$0xf]
      %v462 = vld [vmem:[%s5 + $0xc] sm:$0xf]
      %v463 = vld [vmem:[%s5 + $0x10] sm:$0xf]
      %v464 = vld [vmem:[%s5 + $0x14] sm:$0xf]
      %v465 = vld [vmem:[%s5 + $0x18] sm:$0xf]
      %v466 = vld [vmem:[%s5 + $0x1c] sm:$0xf]
      %v467 = vld [vmem:[%s6] sm:$0x1]
      %v469 = vperm.slane %v467, 0
      %v479 = vunpack.c.l.b16 %v459
      %v480 = vunpack.c.l.b16 %v460
      %v481 = vunpack.c.l.b16 %v461
      %v482 = vunpack.c.l.b16 %v462
      %v483 = vunpack.c.l.b16 %v463
      %v484 = vunpack.c.l.b16 %v464
      %v485 = vunpack.c.l.b16 %v465
      %v486 = vunpack.c.l.b16 %v466
      %v487 = vpack.c.b16 %v480, %v479
      %v488 = vpack.c.b16 %v482, %v481
      %v489 = vpack.c.b16 %v484, %v483
      %v490 = vpack.c.b16 %v486, %v485
      %v496 = vsel %vm405, %v455, 0
      %v499 = vsel %vm405, %v456, 0
      %v502 = vsel %vm405, %v457, 0
      %v505 = vsel %vm405, %v458, 0
      %507 = vmatpush.bf16.msra.mxu0 0
      %508 = vmatpush.bf16.msra.mxu0 0
      %509 = vmatpush.bf16.msra.mxu0 0
      %510 = vmatpush.bf16.msra.mxu0 0
      %511 = vmatpush.bf16.msra.mxu0 %v490
      %512 = vmatpush.bf16.msra.mxu0 %v489
      %513 = vmatpush.bf16.msra.mxu0 %v488
      %514 = vmatpush.bf16.msra.mxu0 %v487
      %515 = vmatmul.bf16.gmra.mxu0 %v496
      %v516 = vpop.f32.mrf.mxu0
      %v517 = vadd.f32 %v469, %v516
      %v518 = vpop.f32.mrf.mxu0
      %v519 = vadd.f32 %v469, %v518
      %520 = vmatmul.bf16.gmra.mxu0 %v499
      %v521 = vpop.f32.mrf.mxu0
      %v522 = vadd.f32 %v469, %v521
      %v523 = vpop.f32.mrf.mxu0
      %v524 = vadd.f32 %v469, %v523
      %525 = vmatmul.bf16.gmra.mxu0 %v502
      %v526 = vpop.f32.mrf.mxu0
      %v527 = vadd.f32 %v469, %v526
      %v528 = vpop.f32.mrf.mxu0
      %v529 = vadd.f32 %v469, %v528
      %530 = vmatmul.bf16.gmra.mxu0 %v505
      %v531 = vpop.f32.mrf.mxu0
      %v532 = vadd.f32 %v469, %v531
      %v533 = vpop.f32.mrf.mxu0
      %v534 = vadd.f32 %v469, %v533
      %535 = vdwg.mxu0
      %536 = vst [vmem:[%s280] sm:$0xff] %v517
      %537 = vst [vmem:[%s280 + $0x8] sm:$0xff] %v519
      %538 = vst [vmem:[%s280 + $0x10] sm:$0xff] %v522
      %539 = vst [vmem:[%s280 + $0x18] sm:$0xff] %v524
      %540 = vst [vmem:[%s280 + $0x20] sm:$0xff] %v527
      %541 = vst [vmem:[%s280 + $0x28] sm:$0xff] %v529
      %542 = vst [vmem:[%s280 + $0x30] sm:$0xff] %v532
      %543 = vst [vmem:[%s280 + $0x38] sm:$0xff] %v534
      %s544 = smul.u32 8, %s18
      %p545 = scmp.lt.s32.totalorder %s544, 31
      %s546 = scalar_select %p545, %s544, 31
      %s547 = smul.addr %s546, 8
      %s548 = scalar_lea.vmem %s7, %s547
      // Predicated region
      $region49: #{baseline_decoder_forward.1} parent=47 // pred_check
        %p549 = pneg %p188
      $region50: #{baseline_decoder_forward.1} parent=47 // pred_check_branch
        %551 = sbr.rel (%p549) target = $region52
      $region51: #{baseline_decoder_forward.1} parent=47 // pred_region
        %s552 = smul.u32 8, %s18
      $region52: #{baseline_decoder_forward.1} parent=47 // pred_fallthru
        _
    $region48: #{baseline_decoder_forward.1} parent=5 // pred_fallthru
      _
    %p553 = scmp.le.s32.totalorder 2, %s13
    // Predicated region
    $region53: #{baseline_decoder_forward.1} parent=5 // pred_check
      %p554 = pneg %p553
    $region54: #{baseline_decoder_forward.1} parent=5 // pred_check_branch
      %556 = sbr.rel (%p554) target = $region56
    $region55: #{baseline_decoder_forward.1} parent=5 // pred_region
      %s557 = ssub.s32 %s13, 2
      // Predicated region
      $region57: #{baseline_decoder_forward.1} parent=55 // pred_check
        %p558 = pneg %p194
      $region58: #{baseline_decoder_forward.1} parent=55 // pred_check_branch
        %560 = sbr.rel (%p558) target = $region60
      $region59: #{baseline_decoder_forward.1} parent=55 // pred_region
        %s561 = smul.u32 8, %s19
        %p562 = scmp.lt.s32.totalorder %s561, 31
        %s563 = scalar_select %p562, %s561, 31
        %s564 = smul.addr %s563, 8
        %s565 = scalar_lea.vmem %s7, %s564
      $region60: #{baseline_decoder_forward.1} parent=55 // pred_fallthru
        _
    $region56: #{baseline_decoder_forward.1} parent=5 // pred_fallthru
      _
  $region6: #{baseline_decoder_forward.1} parent=0 // loop_footer
    %s17 = sadd.s32 1, %s13
  $region7: #{baseline_decoder_forward.1} parent=0 // loop_footer_branch
    %12 = sbr.rel target = $region3
  $region8: #{baseline_decoder_forward.1} parent=0 // loop_exit
    _

</llo_original>
